<compile_context>
chip_gen: v7x
topology: tpu7x:2x2x1
jax: 0.10.0
libtpu: 0.0.40
codegen_flags: <defaults>
</compile_context>

<pallas_src>
import functools

import jax
import jax.numpy as jnp
from jax import lax
from jax.experimental import pallas as pl
from jax.experimental.pallas import tpu as pltpu

LANES = 128
SUBLANES = 8
MAX_ROW_TILE = 2048   # 2048 rows x 128 lanes x 4 B = 1 MiB per input per buffer
NUM_CORES = 2         # leading parallel axis (both TCs on v7x; collapses to 1 if single tile)


def _bce_kernel(x_ref, t_ref, o_ref, acc_ref, *, row_tile, valid_rows, needs_mask):
    c = pl.program_id(0)          # core / parallel axis
    j = pl.program_id(1)          # reduction axis (row tiles)

    @pl.when(j == 0)
    def _():
        acc_ref[...] = jnp.zeros_like(acc_ref)

    x = x_ref[...]
    t = t_ref[...]

    # sanitize: nan -> 0, inf -> 0, > 1 -> 1  (fused into a single select)
    x = jnp.where(jnp.isnan(x) | jnp.isinf(x), 0.0, jnp.minimum(x, 1.0))

    # BCE with PyTorch's -100 clamp on the log terms
    log_x = jnp.maximum(jnp.log(x), -100.0)
    log_1mx = jnp.maximum(jnp.log(1.0 - x), -100.0)
    loss = -(t * log_x + (1.0 - t) * log_1mx)

    if needs_mask:
        # Mask rows belonging to a partial / duplicated last tile.
        tiles_per_core = pl.num_programs(1)
        tile_idx = c * tiles_per_core + j
        row_idx = tile_idx * row_tile + lax.broadcasted_iota(jnp.int32, loss.shape, 0)
        loss = jnp.where(row_idx < valid_rows, loss, 0.0)

    # Vector accumulate: fold the sublane-block axis with VPU adds, keep (8,128).
    acc_ref[...] += loss.reshape(row_tile // SUBLANES, SUBLANES, LANES).sum(axis=0)

    @pl.when(j == pl.num_programs(1) - 1)
    def _():
        o_ref[...] = acc_ref[...]


def bce_loss(inp, target):
    """Mean-reduced BCE loss matching the reference PyTorch module."""
    n = inp.size
    x = inp.reshape(-1).astype(jnp.float32)
    t = target.reshape(-1).astype(jnp.float32)

    # Pad only the ragged tail up to a multiple of (8, 128) with neutral
    # elements (x=1, t=1 -> exactly zero loss).  For "nice" sizes (like the
    # test case) this is a no-op: no extra HBM pass.
    rows = (n + LANES - 1) // LANES
    rows_p = ((rows + SUBLANES - 1) // SUBLANES) * SUBLANES
    pad = rows_p * LANES - n
    if pad > 0:
        x = jnp.pad(x, (0, pad), constant_values=1.0)
        t = jnp.pad(t, (0, pad), constant_values=1.0)

    x2 = x.reshape(rows_p, LANES)
    t2 = t.reshape(rows_p, LANES)

    row_tile = min(MAX_ROW_TILE, rows_p)                       # multiple of 8
    num_tiles = (rows_p + row_tile - 1) // row_tile
    ncores = NUM_CORES if num_tiles >= NUM_CORES else 1
    tiles_per_core = (num_tiles + ncores - 1) // ncores
    needs_mask = ncores * tiles_per_core * row_tile > rows_p

    kernel = functools.partial(
        _bce_kernel,
        row_tile=row_tile,
        valid_rows=rows_p,
        needs_mask=needs_mask,
    )

    def in_map(c, j):
        t_idx = c * tiles_per_core + j
        # Clamp so an "extra" tile of a core re-reads the last valid block;
        # its rows are fully masked out in-kernel.
        return (jnp.minimum(t_idx, num_tiles - 1), 0)

    partials = pl.pallas_call(
        kernel,
        out_shape=jax.ShapeDtypeStruct((ncores * SUBLANES, LANES), jnp.float32),
        grid_spec=pltpu.PrefetchScalarGridSpec(
            num_scalar_prefetch=0,
            grid=(ncores, tiles_per_core),
            in_specs=[
                pl.BlockSpec((row_tile, LANES), in_map),
                pl.BlockSpec((row_tile, LANES), in_map),
            ],
            out_specs=pl.BlockSpec((SUBLANES, LANES), lambda c, j: (c, 0)),
            scratch_shapes=[pltpu.VMEM((SUBLANES, LANES), jnp.float32)],
        ),
        compiler_params=pltpu.CompilerParams(
            dimension_semantics=("parallel", "arbitrary"),
        ),
    )(x2, t2)

    # Single cross-lane reduction, once, on the tiny partial-sum slab.
    return jnp.sum(partials) / jnp.float32(n)


if __name__ == "__main__":
    key = jax.random.PRNGKey(0)
    k1, k2 = jax.random.split(key)

    # small NCHW inputs consistent with an image-style BCE loss
    shape = (2, 4, 16, 16)
    inp = jax.random.uniform(k1, shape, dtype=jnp.float32)
    # sprinkle in out-of-range / non-finite values to exercise sanitization
    inp = inp.at[0, 0, 0, 0].set(jnp.nan)
    inp = inp.at[0, 1, 2, 3].set(jnp.inf)
    inp = inp.at[1, 2, 4, 5].set(1.7)
    target = (jax.random.uniform(k2, shape, dtype=jnp.float32) > 0.5).astype(
        jnp.float32
    )

    loss = bce_loss(inp, target)
    jax.block_until_ready(loss)

    # reference check in plain JAX
    x = jnp.where(jnp.isnan(inp), 0.0, inp)
    x = jnp.where(jnp.isinf(x), 0.0, x)
    x = jnp.where(x > 1.0, 1.0, x)
    ref = jnp.mean(
        -(
            target * jnp.maximum(jnp.log(x), -100.0)
            + (1.0 - target) * jnp.maximum(jnp.log(1.0 - x), -100.0)
        )
    )
    assert jnp.allclose(loss, ref, rtol=1e-5, atol=1e-5), (loss, ref)

    print("KERNEL_OK")
</pallas_src>

<mosaic_0001>
module attributes {stable_mosaic.version = 11 : i64} {
  func.func @_bce_kernel(%arg0: i32, %arg1: i32, %arg2: memref<16x128xf32, #tpu.memory_space<vmem>>, %arg3: memref<16x128xf32, #tpu.memory_space<vmem>>, %arg4: memref<8x128xf32, #tpu.memory_space<vmem>>, %arg5: memref<8x128xf32, #tpu.memory_space<vmem>>) attributes {dimension_semantics = [#tpu.dimension_semantics<parallel>, #tpu.dimension_semantics<arbitrary>], iteration_bounds = array<i64: 1, 1>, scalar_prefetch = 0 : i64, scratch_operands = 1 : i64, tpu.core_type = #tpu.core_type<tc>, window_params = [{transform_indices = @transform_0, window_bounds = array<i64: 16, 128>}, {transform_indices = @transform_1, window_bounds = array<i64: 16, 128>}, {transform_indices = @transform_2, window_bounds = array<i64: 8, 128>}]} {
    %c0_i32 = arith.constant 0 : i32
    %0 = arith.cmpi eq, %arg1, %c0_i32 : i32
    %1 = arith.extui %0 : i1 to i32
    %c0_i32_0 = arith.constant 0 : i32
    %2 = arith.cmpi ne, %1, %c0_i32_0 : i32
    scf.if %2 {
      %cst_18 = arith.constant 0.000000e+00 : f32
      %37 = vector.broadcast %cst_18 : f32 to vector<8x128xf32>
      %c0_19 = arith.constant 0 : index
      %c0_20 = arith.constant 0 : index
      %38 = vector.load %arg5[%c0_19, %c0_20] : memref<8x128xf32, #tpu.memory_space<vmem>>, vector<8x128xf32>
      tpu.vector_store %arg5[%c0_19, %c0_20], %37 {strides = array<i32>} : memref<8x128xf32, #tpu.memory_space<vmem>>, vector<8x128xf32>,
    } else {
    }
    %c0 = arith.constant 0 : index
    %c0_1 = arith.constant 0 : index
    %3 = vector.load %arg2[%c0, %c0_1] : memref<16x128xf32, #tpu.memory_space<vmem>>, vector<16x128xf32>
    %c0_2 = arith.constant 0 : index
    %c0_3 = arith.constant 0 : index
    %4 = vector.load %arg3[%c0_2, %c0_3] : memref<16x128xf32, #tpu.memory_space<vmem>>, vector<16x128xf32>
    %5 = arith.cmpf one, %3, %3 : vector<16x128xf32>
    %6 = math.absf %3 : vector<16x128xf32>
    %cst = arith.constant 0x7F800000 : f32
    %7 = vector.broadcast %cst : f32 to vector<16x128xf32>
    %8 = arith.cmpf oeq, %6, %7 : vector<16x128xf32>
    %9 = arith.ori %5, %8 : vector<16x128xi1>
    %cst_4 = arith.constant 1.000000e+00 : f32
    %10 = vector.broadcast %cst_4 : f32 to vector<16x128xf32>
    %11 = arith.minimumf %3, %10 : vector<16x128xf32>
    %cst_5 = arith.constant 0.000000e+00 : f32
    %12 = vector.broadcast %cst_5 : f32 to vector<16x128xf32>
    %13 = arith.select %9, %12, %11 : vector<16x128xi1>, vector<16x128xf32>
    %14 = math.log %13 : vector<16x128xf32>
    %cst_6 = arith.constant -1.000000e+02 : f32
    %15 = vector.broadcast %cst_6 : f32 to vector<16x128xf32>
    %16 = arith.maximumf %14, %15 : vector<16x128xf32>
    %cst_7 = arith.constant 1.000000e+00 : f32
    %17 = vector.broadcast %cst_7 : f32 to vector<16x128xf32>
    %18 = arith.subf %17, %13 : vector<16x128xf32>
    %19 = math.log %18 : vector<16x128xf32>
    %cst_8 = arith.constant -1.000000e+02 : f32
    %20 = vector.broadcast %cst_8 : f32 to vector<16x128xf32>
    %21 = arith.maximumf %19, %20 : vector<16x128xf32>
    %22 = arith.mulf %4, %16 : vector<16x128xf32>
    %cst_9 = arith.constant 1.000000e+00 : f32
    %23 = vector.broadcast %cst_9 : f32 to vector<16x128xf32>
    %24 = arith.subf %23, %4 : vector<16x128xf32>
    %25 = arith.mulf %24, %21 : vector<16x128xf32>
    %26 = arith.addf %22, %25 : vector<16x128xf32>
    %cst_10 = arith.constant 0.000000e+00 : f32
    %27 = vector.broadcast %cst_10 : f32 to vector<16x128xf32>
    %28 = arith.subf %27, %26 : vector<16x128xf32>
    %c0_11 = arith.constant 0 : index
    %c0_12 = arith.constant 0 : index
    %29 = vector.load %arg5[%c0_11, %c0_12] : memref<8x128xf32, #tpu.memory_space<vmem>>, vector<8x128xf32>
    %30 = vector.shape_cast %28 : vector<16x128xf32> to vector<2x8x128xf32>
    %cst_13 = arith.constant dense<0.000000e+00> : vector<8x128xf32>
    %31 = vector.multi_reduction <add>, %30, %cst_13 [0] : vector<2x8x128xf32> to vector<8x128xf32>
    %32 = arith.addf %29, %31 : vector<8x128xf32>
    %c0_14 = arith.constant 0 : index
    %c0_15 = arith.constant 0 : index
    %33 = vector.load %arg5[%c0_14, %c0_15] : memref<8x128xf32, #tpu.memory_space<vmem>>, vector<8x128xf32>
    tpu.vector_store %arg5[%c0_14, %c0_15], %32 {strides = array<i32>} : memref<8x128xf32, #tpu.memory_space<vmem>>, vector<8x128xf32>,
    %c0_i32_16 = arith.constant 0 : i32
    %34 = arith.cmpi eq, %arg1, %c0_i32_16 : i32
    %35 = arith.extui %34 : i1 to i32
    %c0_i32_17 = arith.constant 0 : i32
    %36 = arith.cmpi ne, %35, %c0_i32_17 : i32
    scf.if %36 {
      %c0_18 = arith.constant 0 : index
      %c0_19 = arith.constant 0 : index
      %37 = vector.load %arg5[%c0_18, %c0_19] : memref<8x128xf32, #tpu.memory_space<vmem>>, vector<8x128xf32>
      %c0_20 = arith.constant 0 : index
      %c0_21 = arith.constant 0 : index
      %38 = vector.load %arg4[%c0_20, %c0_21] : memref<8x128xf32, #tpu.memory_space<vmem>>, vector<8x128xf32>
      tpu.vector_store %arg4[%c0_20, %c0_21], %37 {strides = array<i32>} : memref<8x128xf32, #tpu.memory_space<vmem>>, vector<8x128xf32>,
    } else {
    }
    return
  }
  func.func @transform_0(%arg0: i32, %arg1: i32) -> (i32, i32) {
    %c1_i32 = arith.constant 1 : i32
    %0 = arith.muli %arg0, %c1_i32 : i32
    %1 = arith.addi %0, %arg1 : i32
    %c0_i32 = arith.constant 0 : i32
    %2 = arith.minsi %1, %c0_i32 : i32
    %c0_i32_0 = arith.constant 0 : i32
    %c0_i32_1 = arith.constant 0 : i32
    return %2, %c0_i32_0 : i32, i32
  }
  func.func @transform_1(%arg0: i32, %arg1: i32) -> (i32, i32) {
    %c1_i32 = arith.constant 1 : i32
    %0 = arith.muli %arg0, %c1_i32 : i32
    %1 = arith.addi %0, %arg1 : i32
    %c0_i32 = arith.constant 0 : i32
    %2 = arith.minsi %1, %c0_i32 : i32
    %c0_i32_0 = arith.constant 0 : i32
    %c0_i32_1 = arith.constant 0 : i32
    return %2, %c0_i32_0 : i32, i32
  }
  func.func @transform_2(%arg0: i32, %arg1: i32) -> (i32, i32) {
    %c0_i32 = arith.constant 0 : i32
    %c0_i32_0 = arith.constant 0 : i32
    return %arg0, %c0_i32 : i32, i32
  }
}

</mosaic_0001>

<llo_original>
// kernel: tpu_custom_call.1
$region0: #{tpu_custom_call.1}
  #allocation0 [shape = 'u32[]', space=smem, size = 0x4, offset = 0x4, fixed_abs, tag = 'smem constant byte address 0x4 - core index']
  #allocation1 [shape = 'u32[144,128]{1,0:T(1,128)}', space=vmem, size = 0x12000, scoped, tag = 'internal scratch']
  #allocation2 [shape = 'f32[8,128]{1,0:T(8,128)}', space=vmem, size = 0x1000, scoped, tag = 'scratch operand']
  %s0 = inlined_call_operand.hbm [shape: f32[16,128], index: 0, kind: input, shape index: {}]
  %s1 = inlined_call_operand.hbm [shape: f32[16,128], index: 1, kind: input, shape index: {}]
  %s2 = inlined_call_operand.hbm [shape: f32[8,128], index: 2, kind: output, shape index: {}]
  %s3 = sld [smem:[#allocation0]]
  $region34: #{tpu_custom_call.1} parent=0
    _
  %s5 = ssub.s32 1, %s3
  %s6 = scalar_select 0, %s5, %s3
  $region1: #{tpu_custom_call.1} parent=0
    #allocation3 [shape = 'u8[8192]{0}', space=vmem, size = 0x2000, scoped, tag = 'input window, operand 0, single buffered']
    #allocation4 [shape = 's32[1]{0}', space=sflag, size = 0x4, scoped, tag = 'scoped memory for tpu_custom_call.1']
    #allocation5 [shape = 's32[1]{0}', space=sflag, size = 0x4, scoped, tag = 'scoped memory for tpu_custom_call.1']
    #allocation6 [shape = 'u8[8192]{0}', space=vmem, size = 0x2000, scoped, tag = 'input window, operand 1, single buffered']
    #allocation7 [shape = 's32[1]{0}', space=sflag, size = 0x4, scoped, tag = 'scoped memory for tpu_custom_call.1']
    #allocation8 [shape = 'u8[4096]{0}', space=vmem, size = 0x1000, scoped, tag = 'output window, operand 0, single buffered']
    %7 = vsyncpa [#allocation4], 0
    %8 = vsyncpa [#allocation7], 0
    %9 = vsyncpa [#allocation5], 0
    // Predicated region
    $region2: #{tpu_custom_call.1} parent=1 // pred_check
      _
    $region3: #{tpu_custom_call.1} parent=1 // pred_check_branch
      %11 = sbr.rel (0) target = $region5
    $region4: #{tpu_custom_call.1} parent=1 // pred_region
      %s12 = sadd.s32 0, 0
      %p13 = scmp.lt.s32.totalorder %s12, 0
      %s14 = scalar_select %p13, %s12, 0
      %s15 = smul.u32 2, %s14
      %s17 = ssub.s32 256, 256
      %18 = vsyncadd [#allocation4], %s17
      %s19 = smul.addr %s15, 128
      %s20 = scalar_lea.hbm %s0, %s19
      %s21 = sshll.u32 [#allocation3], 4
      %s22 = int_to_ptr.vmem [resolvable:$true] %s21
      %27 = dma.hbm_to_vmem [thread:$0]  %s20, 256, %s22, [#allocation4], 128, 128, 8
    $region5: #{tpu_custom_call.1} parent=1 // pred_fallthru
      _
    // Predicated region
    $region6: #{tpu_custom_call.1} parent=1 // pred_check
      _
    $region7: #{tpu_custom_call.1} parent=1 // pred_check_branch
      %29 = sbr.rel (0) target = $region9
    $region8: #{tpu_custom_call.1} parent=1 // pred_region
      %s30 = sadd.s32 0, 0
      %p31 = scmp.lt.s32.totalorder %s30, 0
      %s32 = scalar_select %p31, %s30, 0
      %s33 = smul.u32 2, %s32
      %s35 = ssub.s32 256, 256
      %36 = vsyncadd [#allocation7], %s35
      %s37 = smul.addr %s33, 128
      %s38 = scalar_lea.hbm %s1, %s37
      %s39 = sshll.u32 [#allocation6], 4
      %s40 = int_to_ptr.vmem [resolvable:$true] %s39
      %45 = dma.hbm_to_vmem [thread:$0]  %s38, 256, %s40, [#allocation7], 128, 128, 8
    $region9: #{tpu_custom_call.1} parent=1 // pred_fallthru
      _
    // Predicated region
    $region10: #{tpu_custom_call.1} parent=1 // pred_check
      _
    $region11: #{tpu_custom_call.1} parent=1 // pred_check_branch
      %47 = sbr.rel (0) target = $region13
    $region12: #{tpu_custom_call.1} parent=1 // pred_region
      %48 = dma.done [#allocation4], 256
    $region13: #{tpu_custom_call.1} parent=1 // pred_fallthru
      _
    // Predicated region
    $region14: #{tpu_custom_call.1} parent=1 // pred_check
      _
    $region15: #{tpu_custom_call.1} parent=1 // pred_check_branch
      %50 = sbr.rel (0) target = $region17
    $region16: #{tpu_custom_call.1} parent=1 // pred_region
      %51 = dma.done [#allocation7], 256
    $region17: #{tpu_custom_call.1} parent=1 // pred_fallthru
      _
    %s52 = sadd.s32 0, 0
    %p53 = scmp.lt.s32.totalorder %s52, 0
    %s54 = scalar_select %p53, %s52, 0
    %s55 = smul.u32 2, %s54
    %s56 = sadd.s32 0, 0
    %p57 = scmp.lt.s32.totalorder %s56, 0
    %s58 = scalar_select %p57, %s56, 0
    %s59 = smul.u32 2, %s58
    %p60 = scmp.eq.s32.totalorder 0, 0
    // Predicated region
    $region18: #{tpu_custom_call.1} parent=1 // pred_check
      %p61 = pneg %p60
    $region19: #{tpu_custom_call.1} parent=1 // pred_check_branch
      %63 = sbr.rel (%p61) target = $region21
    $region20: #{tpu_custom_call.1} parent=1 // pred_region
      %64 = vst [vmem:[#allocation2] sm:$0xff] 0.0
    $region21: #{tpu_custom_call.1} parent=1 // pred_fallthru
      _
    %v65 = vld [vmem:[#allocation3] sm:$0xff]
    %v66 = vld [vmem:[#allocation3 + $0x8] sm:$0xff]
    %v67 = vld [vmem:[#allocation6] sm:$0xff]
    %v68 = vld [vmem:[#allocation6 + $0x8] sm:$0xff]
    %vm69 = vcmp.ne.f32.partialorder %v65, %v65
    %vm70 = vcmp.ne.f32.partialorder %v66, %v66
    %v71 = vand.u32 2147483647, %v65
    %v72 = vand.u32 2147483647, %v66
    %vm73 = vcmp.eq.f32.partialorder %v71, inf
    %vm74 = vcmp.eq.f32.partialorder %v72, inf
    %vm75 = vmor %vm69, %vm73
    %vm76 = vmor %vm70, %vm74
    %v77 = vmin.f32 %v65, 1.0
    %v78 = vmin.f32 %v66, 1.0
    %v79 = vsel %vm75, 0.0, %v77
    %v80 = vsel %vm76, 0.0, %v78
    %v81 = vlog2.pop %v79
    %v82 = vmul.f32 %v81, 0.6931472
    %v83 = vlog2.pop %v80
    %v84 = vmul.f32 %v83, 0.6931472
    %v85 = vmax.f32 %v82, -100.0
    %v86 = vmax.f32 %v84, -100.0
    %v87 = vsub.f32 1.0, %v79
    %v88 = vsub.f32 1.0, %v80
    %v89 = vlog2.pop %v87
    %v90 = vmul.f32 %v89, 0.6931472
    %v91 = vlog2.pop %v88
    %v92 = vmul.f32 %v91, 0.6931472
    %v93 = vmax.f32 %v90, -100.0
    %v94 = vmax.f32 %v92, -100.0
    %v95 = vmul.f32 %v67, %v85
    %v96 = vmul.f32 %v68, %v86
    %v97 = vsub.f32 1.0, %v67
    %v98 = vsub.f32 1.0, %v68
    %v99 = vmul.f32 %v97, %v93
    %v100 = vmul.f32 %v98, %v94
    %v101 = vadd.f32 %v95, %v99
    %v102 = vadd.f32 %v96, %v100
    %v103 = vsub.f32 0.0, %v101
    %v104 = vsub.f32 0.0, %v102
    %v105 = vld [vmem:[#allocation2] sm:$0xff]
    %v106 = vadd.f32 %v103, %v104
    %v107 = vadd.f32 %v105, %v106
    %108 = vst [vmem:[#allocation2] sm:$0xff] %v107
    // Predicated region
    $region22: #{tpu_custom_call.1} parent=1 // pred_check
      %p109 = pneg %p60
    $region23: #{tpu_custom_call.1} parent=1 // pred_check_branch
      %111 = sbr.rel (%p109) target = $region25
    $region24: #{tpu_custom_call.1} parent=1 // pred_region
      %v112 = vld [vmem:[#allocation2] sm:$0xff]
      %113 = vst [vmem:[#allocation8] sm:$0xff] %v112
    $region25: #{tpu_custom_call.1} parent=1 // pred_fallthru
      _
    // Predicated region
    $region26: #{tpu_custom_call.1} parent=1 // pred_check
      _
    $region27: #{tpu_custom_call.1} parent=1 // pred_check_branch
      %115 = sbr.rel (0) target = $region29
    $region28: #{tpu_custom_call.1} parent=1 // pred_region
      %s117 = ssub.s32 128, 128
      %118 = vsyncadd [#allocation5], %s117
      %s120 = sshll.u32 [#allocation8], 4
      %s121 = int_to_ptr.vmem [resolvable:$true] %s120
      %123 = dma.vmem_to_hbm [thread:$0]  %s121, 128, %s2, [#allocation5]
    $region29: #{tpu_custom_call.1} parent=1 // pred_fallthru
      _
    // Predicated region
    $region30: #{tpu_custom_call.1} parent=1 // pred_check
      _
    $region31: #{tpu_custom_call.1} parent=1 // pred_check_branch
      %125 = sbr.rel (0) target = $region33
    $region32: #{tpu_custom_call.1} parent=1 // pred_region
      %126 = dma.done [#allocation5], 128
    $region33: #{tpu_custom_call.1} parent=1 // pred_fallthru
      _
    %127 = vsyncpa [#allocation4], 1
    %128 = vsyncpa [#allocation7], 1
    %129 = vsyncpa [#allocation5], 1

</llo_original>
